<compile_context>
chip_gen: v5e
topology: v5e:2x2
jax: 0.10.0
libtpu: 0.0.40
codegen_flags: <defaults>
</compile_context>

<pallas_src>
import math

import jax
import jax.numpy as jnp
from jax import lax
from jax.experimental import pallas as pl
from jax.experimental.pallas import tpu as pltpu


# ----------------------------- Pallas kernel -------------------------------

def _resample_kernel(x_ref, src_ref, o_ref):
    # Synthesize the one-hot gather tile G (HW_in, tn) in-register from the
    # per-output-pixel source-index table (invalid pixels hold -1, which never
    # matches an input row -> zero fill), then resample via one MXU matmul:
    #   out[p, o] = sum_s x[p, s] * (s == src[o])
    hw_in = x_ref.shape[1]
    tn = o_ref.shape[1]
    row_ids = lax.broadcasted_iota(jnp.int32, (hw_in, tn), 0)
    g = (row_ids == src_ref[...]).astype(x_ref.dtype)        # (HW_in, tn) 0/1
    o_ref[...] = jnp.dot(
        x_ref[...], g, preferred_element_type=jnp.float32
    ).astype(o_ref.dtype)


def _round_up(v, m):
    return ((v + m - 1) // m) * m


def _apply_gather(x_flat, src_table):
    """x_flat: (M, HW);  src_table: (1, HW) int32 with -1 marking zero-fill."""
    M, HW = x_flat.shape
    tm = min(512, _round_up(M, 8))              # fill MXU rows; no pad of x needed
    n_row_blocks = pl.cdiv(M, tm)

    # Row-first grid split.  Column split only when there is a single row
    # block (tiny B*C) so both v7x TensorCores get a parallel step; on
    # single-TC chips the extra step is negligible now that no G is streamed.
    if n_row_blocks == 1 and HW % 256 == 0:
        tn = HW // 2
    else:
        # TODO(synk): for HW not a multiple of 128 (e.g. MNIST 784) the output
        # stores are masked (vst.msk); pad columns to 896 only if MNIST is hot.
        tn = HW
    grid = (n_row_blocks, HW // tn)

    dsize = jnp.dtype(x_flat.dtype).itemsize
    cost = pl.CostEstimate(
        flops=2 * M * HW * HW,
        transcendentals=0,
        bytes_accessed=2 * M * HW * dsize + 4 * HW,
    )

    # Working-set estimate (double-buffered x/out tiles + synthesized G temp).
    vmem_est = (2 * tm * HW + 2 * tm * tn + HW * tn) * dsize + 8 * HW
    vmem_limit = None
    if vmem_est > (12 << 20):                   # only bump when near v5e default
        vmem_limit = int(min(2 * vmem_est, 48 << 20))

    return pl.pallas_call(
        _resample_kernel,
        out_shape=jax.ShapeDtypeStruct((M, HW), x_flat.dtype),
        grid_spec=pltpu.PrefetchScalarGridSpec(
            num_scalar_prefetch=0,
            grid=grid,
            in_specs=[
                pl.BlockSpec((tm, HW), lambda i, j: (i, 0)),   # x rows, full K
                pl.BlockSpec((1, tn), lambda i, j: (0, j)),    # src index slab
            ],
            out_specs=pl.BlockSpec((tm, tn), lambda i, j: (i, j)),
        ),
        compiler_params=pltpu.CompilerParams(
            dimension_semantics=("parallel", "parallel"),
            vmem_limit_bytes=vmem_limit,
        ),
        cost_estimate=cost,
    )(x_flat, src_table)


# ------------------------- transform-parameter glue ------------------------

def _build_src_table(key, H, W, pad, max_deg, flip_enabled):
    """Per-output-pixel source index (row-major; -1 = zero fill) for
    Flip(Rot(Crop(x))) with the module's sampled parameters.  Shape (1, HW)."""
    k = jax.random.split(key, 6)

    # ProbTransform(RandomCrop, p=0.8)  (zero padding, random offset)
    apply_crop = jax.random.uniform(k[0]) < 0.8
    ci = jax.random.randint(k[1], (), 0, 2 * pad + 1)
    cj = jax.random.randint(k[2], (), 0, 2 * pad + 1)
    ci = jnp.where(apply_crop, ci, pad)         # offset == pad -> identity crop
    cj = jnp.where(apply_crop, cj, pad)

    # ProbTransform(RandomRotation, p=0.5)  (nearest interpolation, fill=0)
    apply_rot = jax.random.uniform(k[3]) < 0.5
    angle_deg = jax.random.uniform(k[4], (), minval=-max_deg, maxval=max_deg)
    angle_deg = jnp.where(apply_rot, angle_deg, 0.0)

    # RandomHorizontalFlip(p=0.5)  (cifar10 only)
    apply_flip = jnp.logical_and(flip_enabled, jax.random.uniform(k[5]) < 0.5)

    ys, xs = jnp.meshgrid(jnp.arange(H), jnp.arange(W), indexing="ij")

    # Invert the flip (applied last in forward).
    x1 = jnp.where(apply_flip, W - 1 - xs, xs)
    y1 = ys

    # Invert the rotation (nearest neighbor, about the image center).
    # TODO(synk): torchvision rotates about (W/2, H/2); we use ((W-1)/2,(H-1)/2),
    # distributionally equivalent but not bit-identical to the PyTorch module.
    theta = angle_deg * (math.pi / 180.0)
    c, s = jnp.cos(theta), jnp.sin(theta)
    cx, cy = (W - 1) / 2.0, (H - 1) / 2.0
    xc = x1.astype(jnp.float32) - cx
    yc = y1.astype(jnp.float32) - cy
    xr = c * xc + s * yc
    yr = -s * xc + c * yc
    x2 = jnp.round(xr + cx).astype(jnp.int32)
    y2 = jnp.round(yr + cy).astype(jnp.int32)
    valid = (x2 >= 0) & (x2 < W) & (y2 >= 0) & (y2 < H)

    # Invert the zero-padded random crop: out(y,x) <- in(y+ci-pad, x+cj-pad).
    y3 = y2 + ci - pad
    x3 = x2 + cj - pad
    valid = valid & (x3 >= 0) & (x3 < W) & (y3 >= 0) & (y3 < H)

    src = jnp.clip(y3, 0, H - 1) * W + jnp.clip(x3, 0, W - 1)       # (H, W)
    src = jnp.where(valid, src, -1).astype(jnp.int32)
    return src.reshape(1, H * W)


def post_tensor_transform(x, key, *, random_crop_pad, random_rotation_deg,
                          dataset="cifar10"):
    """Forward pass of PostTensorTransform on an NCHW batch."""
    B, C, H, W = x.shape
    src_table = _build_src_table(
        key, H, W, random_crop_pad, float(random_rotation_deg),
        dataset == "cifar10",
    )
    x_flat = x.reshape(B * C, H * W)
    out_flat = _apply_gather(x_flat, src_table)
    return out_flat.reshape(B, C, H, W)


# --------------------------------- main -------------------------------------

if __name__ == "__main__":
    # args equivalent: input_height=input_width=16, random_crop=4,
    #                  random_rotation=10, dataset='cifar10'
    B, C, H, W = 2, 4, 16, 16
    pad, max_deg = 4, 10

    key = jax.random.PRNGKey(0)
    kx, kt = jax.random.split(key)
    x = jax.random.normal(kx, (B, C, H, W), dtype=jnp.float32)

    out = post_tensor_transform(
        x, kt, random_crop_pad=pad, random_rotation_deg=max_deg, dataset="cifar10"
    )
    out = jax.block_until_ready(out)

    # Pure-JAX reference of the same resampling (validates the Pallas kernel).
    src = _build_src_table(kt, H, W, pad, float(max_deg), True).reshape(-1)
    x_flat = x.reshape(B * C, H * W)
    gathered = jnp.take(x_flat, jnp.clip(src, 0, H * W - 1), axis=1)
    ref = jnp.where(src[None, :] >= 0, gathered, 0.0).reshape(B, C, H, W)

    assert out.shape == x.shape and out.dtype == x.dtype
    assert jnp.allclose(out, ref, atol=1e-5, rtol=1e-5)

    print("KERNEL_OK")
</pallas_src>

<mosaic_0001>
module attributes {stable_mosaic.version = 11 : i64} {
  func.func @_resample_kernel(%arg0: i32, %arg1: i32, %arg2: memref<8x256xf32, #tpu.memory_space<vmem>>, %arg3: memref<1x128xi32, #tpu.memory_space<vmem>>, %arg4: memref<8x128xf32, #tpu.memory_space<vmem>>) attributes {dimension_semantics = [#tpu.dimension_semantics<parallel>, #tpu.dimension_semantics<parallel>], iteration_bounds = array<i64: 1, 2>, scalar_prefetch = 0 : i64, scratch_operands = 0 : i64, tpu.core_type = #tpu.core_type<tc>, window_params = [{transform_indices = @transform_0, window_bounds = array<i64: 8, 256>}, {transform_indices = @transform_1, window_bounds = array<i64: 1, 128>}, {transform_indices = @transform_2, window_bounds = array<i64: 8, 128>}]} {
    %0 = tpu.iota {dimensions = array<i32: 0>} : vector<256x128xi32>
    %c0 = arith.constant 0 : index
    %c0_0 = arith.constant 0 : index
    %1 = vector.load %arg3[%c0, %c0_0] : memref<1x128xi32, #tpu.memory_space<vmem>>, vector<1x128xi32>
    %2 = vector.broadcast %1 : vector<1x128xi32> to vector<256x128xi32>
    %3 = arith.cmpi eq, %0, %2 : vector<256x128xi32>
    %4 = arith.extui %3 : vector<256x128xi1> to vector<256x128xi32>
    %5 = arith.sitofp %4 : vector<256x128xi32> to vector<256x128xf32>
    %c0_1 = arith.constant 0 : index
    %c0_2 = arith.constant 0 : index
    %6 = vector.load %arg2[%c0_1, %c0_2] : memref<8x256xf32, #tpu.memory_space<vmem>>, vector<8x256xf32>
    %cst = arith.constant dense<0.000000e+00> : vector<8x128xf32>
    %7 = tpu.matmul %6, %5, %cst {dimension_numbers = #tpu.dot_dimension_numbers<[1], [0], [0], [1], [0, 0, 1, 1], [], []>} : vector<8x256xf32>, vector<256x128xf32>, vector<8x128xf32> -> vector<8x128xf32>
    %c0_3 = arith.constant 0 : index
    %c0_4 = arith.constant 0 : index
    %8 = vector.load %arg4[%c0_3, %c0_4] : memref<8x128xf32, #tpu.memory_space<vmem>>, vector<8x128xf32>
    tpu.vector_store %arg4[%c0_3, %c0_4], %7 {strides = array<i32>} : memref<8x128xf32, #tpu.memory_space<vmem>>, vector<8x128xf32>,
    return
  }
  func.func @transform_0(%arg0: i32, %arg1: i32) -> (i32, i32) {
    %c0_i32 = arith.constant 0 : i32
    %c0_i32_0 = arith.constant 0 : i32
    return %arg0, %c0_i32 : i32, i32
  }
  func.func @transform_1(%arg0: i32, %arg1: i32) -> (i32, i32) {
    %c0_i32 = arith.constant 0 : i32
    %c0_i32_0 = arith.constant 0 : i32
    return %c0_i32, %arg1 : i32, i32
  }
  func.func @transform_2(%arg0: i32, %arg1: i32) -> (i32, i32) {
    %c0_i32 = arith.constant 0 : i32
    return %arg0, %arg1 : i32, i32
  }
}

</mosaic_0001>

<llo_original>
// kernel: tpu_custom_call.1
$region0: #{tpu_custom_call.1}
  #allocation0 [shape = 'u32[]', space=smem, size = 0x4, offset = 0x4, fixed_abs, tag = 'smem constant byte address 0x4 - core index']
  #allocation1 [shape = 'u32[72,128]{1,0:T(1,128)}', space=vmem, size = 0x9000, scoped, tag = 'internal scratch']
  %s0 = inlined_call_operand.hbm [shape: f32[8,256], index: 0, kind: input, shape index: {}]
  %s1 = inlined_call_operand.hbm [shape: s32[1,256], index: 1, kind: input, shape index: {}]
  %s2 = inlined_call_operand.hbm [shape: f32[8,256], index: 2, kind: output, shape index: {}]
  %s3 = sld [smem:[#allocation0]]
  $region49: #{tpu_custom_call.1} parent=0
    _
  %s5 = ssub.s32 1, %s3
  %s6 = scalar_select 0, %s5, %s3
  $region1: #{tpu_custom_call.1} parent=0
    #allocation2 [shape = 'u8[8192]{0}', space=vmem, size = 0x2000, scoped, tag = 'input window, operand 0, single buffered']
    #allocation3 [shape = 's32[2]{0}', space=sflag, size = 0x8, scoped, tag = 'scoped memory for tpu_custom_call.1']
    #allocation4 [shape = 's32[2]{0}', space=sflag, size = 0x8, scoped, tag = 'scoped memory for tpu_custom_call.1']
    #allocation5 [shape = 'u8[1024]{0}', space=vmem, size = 0x400, scoped, tag = 'input window, operand 1']
    #allocation6 [shape = 's32[2]{0}', space=sflag, size = 0x8, scoped, tag = 'scoped memory for tpu_custom_call.1']
    #allocation7 [shape = 'u8[8192]{0}', space=vmem, size = 0x2000, scoped, tag = 'output window, operand 0']
    %7 = vsyncpa [#allocation3], 0
    %8 = vsyncpa [#allocation6], 0
    %s9 = scalar_lea.sflag [#allocation6], 1
    %10 = vsyncpa %s9, 0
    %11 = vsyncpa [#allocation4], 0
    %s12 = scalar_lea.sflag [#allocation4], 1
    %13 = vsyncpa %s12, 0
    loop: start=0, step=1, limit=4
    $region2: #{tpu_custom_call.1} parent=1 // loop_pre_header
      _
    $region3: #{tpu_custom_call.1} parent=1 // loop_header
      %s15 = sphi 0, %s19
      %p16 = scmp.ge.s32.totalorder %s15, 4
      %s22 = sphi 0, %s34
      %s23 = sphi 0, %s30
      %s24 = sphi 0, %s22
      %s25 = sphi 0, %s23
      %s26 = sphi 0, %s24
      %s27 = sphi 0, %s25
      %s37 = sphi 0, %s39
      %s40 = sphi 0, %s37
      %s41 = sphi 0, %s40
      %s57 = sphi 0, %s41
      %s63 = sphi 0, %s65
      %s66 = sphi 0, %s63
      %s67 = sphi 0, %s66
      %s83 = sphi 0, %s67
      %s91 = sphi 0, %s93
      %s94 = sphi 0, %s91
      %s95 = sphi 0, %s94
      %s111 = sphi 0, %s95
    $region4: #{tpu_custom_call.1} parent=1 // loop_header_branch
      %18 = sbr.rel (%p16) target = $region8
    $region5: #{tpu_custom_call.1} parent=1 // loop_body
      %s20 = ssub.s32 %s15, 1
      %s21 = ssub.s32 %s15, 2
      %s28 = sadd.s32 1, %s23
      %p29 = scmp.ge.s32.totalorder %s28, 2
      %s30 = scalar_select %p29, 0, %s28
      %s31 = sadd.s32 1, %s22
      %s32 = scalar_select %p29, %s31, %s22
      %p33 = scmp.ge.s32.totalorder %s32, 1
      %s34 = scalar_select %p33, 0, %s32
      %s35 = ssub.s32 %s22, %s34
      %p36 = scmp.eq.s32.totalorder %s35, 0
      %s38 = sadd.s32 %s37, 1
      %s39 = scalar_select %p36, %s37, %s38
      %p42 = pneg %p36
      %p43 = scmp.eq.s32.totalorder %s15, 1
      %p44 = por %p42, %p43
      %p45 = scmp.ne.s32.totalorder %s37, %s40
      %p46 = scmp.eq.s32.totalorder %s15, 0
      %p47 = por %p45, %p46
      %p48 = scmp.ne.s32.totalorder %s37, %s40
      %p49 = scmp.eq.s32.totalorder %s20, 1
      %p50 = por %p48, %p49
      %p51 = scmp.ne.s32.totalorder %s40, %s41
      %p52 = scmp.eq.s32.totalorder %s20, 0
      %p53 = por %p51, %p52
      %p54 = scmp.ne.s32.totalorder %s40, %s41
      %p55 = scmp.eq.s32.totalorder %s21, 1
      %p56 = por %p54, %p55
      %p58 = scmp.ne.s32.totalorder %s41, %s57
      %p59 = scmp.eq.s32.totalorder %s21, 0
      %p60 = por %p58, %p59
      %s61 = ssub.s32 %s23, %s30
      %p62 = scmp.eq.s32.totalorder %s61, 0
      %s64 = sadd.s32 %s63, 1
      %s65 = scalar_select %p62, %s63, %s64
      %p68 = pneg %p62
      %p69 = scmp.eq.s32.totalorder %s15, 1
      %p70 = por %p68, %p69
      %p71 = scmp.ne.s32.totalorder %s63, %s66
      %p72 = scmp.eq.s32.totalorder %s15, 0
      %p73 = por %p71, %p72
      %p74 = scmp.ne.s32.totalorder %s63, %s66
      %p75 = scmp.eq.s32.totalorder %s20, 1
      %p76 = por %p74, %p75
      %p77 = scmp.ne.s32.totalorder %s66, %s67
      %p78 = scmp.eq.s32.totalorder %s20, 0
      %p79 = por %p77, %p78
      %p80 = scmp.ne.s32.totalorder %s66, %s67
      %p81 = scmp.eq.s32.totalorder %s21, 1
      %p82 = por %p80, %p81
      %p84 = scmp.ne.s32.totalorder %s67, %s83
      %p85 = scmp.eq.s32.totalorder %s21, 0
      %p86 = por %p84, %p85
      %s87 = ssub.s32 %s22, %s34
      %s88 = ssub.s32 %s23, %s30
      %s89 = sor.u32 %s87, %s88
      %p90 = scmp.eq.s32.totalorder %s89, 0
      %s92 = sadd.s32 %s91, 1
      %s93 = scalar_select %p90, %s91, %s92
      %p96 = pneg %p90
      %p97 = scmp.eq.s32.totalorder %s15, 1
      %p98 = por %p96, %p97
      %p99 = scmp.ne.s32.totalorder %s91, %s94
      %p100 = scmp.eq.s32.totalorder %s15, 0
      %p101 = por %p99, %p100
      %p102 = scmp.ne.s32.totalorder %s91, %s94
      %p103 = scmp.eq.s32.totalorder %s20, 1
      %p104 = por %p102, %p103
      %p105 = scmp.ne.s32.totalorder %s94, %s95
      %p106 = scmp.eq.s32.totalorder %s20, 0
      %p107 = por %p105, %p106
      %p108 = scmp.ne.s32.totalorder %s94, %s95
      %p109 = scmp.eq.s32.totalorder %s21, 1
      %p110 = por %p108, %p109
      %p112 = scmp.ne.s32.totalorder %s95, %s111
      %p113 = scmp.eq.s32.totalorder %s21, 0
      %p114 = por %p112, %p113
      %p115 = scmp.le.s32.totalorder 1, %s15
      %p116 = scmp.lt.s32.totalorder %s15, 3
      %p117 = pnand %p115, %p116
      %p118 = pneg %p117
      // Predicated region
      $region9: #{tpu_custom_call.1} parent=5 // pred_check
        _
      $region10: #{tpu_custom_call.1} parent=5 // pred_check_branch
        %120 = sbr.rel (%p117) target = $region12
      $region11: #{tpu_custom_call.1} parent=5 // pred_region
        %s121 = ssub.s32 %s15, 1
        // Predicated region
        $region13: #{tpu_custom_call.1} parent=11 // pred_check
          %p122 = pneg %p53
        $region14: #{tpu_custom_call.1} parent=11 // pred_check_branch
          %124 = sbr.rel (%p122) target = $region16
        $region15: #{tpu_custom_call.1} parent=11 // pred_region
          %126 = vsyncadd [#allocation3], 0
          %s127 = smul.addr %s24, 2
          %s128 = smul.addr %s127, 8
          %s129 = scalar_lea.hbm %s0, %s128
          %s131 = sshll.u32 %s129, 4
          %s132 = int_to_ptr.hbm [resolvable:$true] %s131
          %s133 = sshll.u32 [#allocation2], 4
          %s134 = int_to_ptr.vmem [resolvable:$true] %s133
          %136 = dma.hbm_to_vmem [thread:$0]  %s132, 256, %s134, [#allocation3]
        $region16: #{tpu_custom_call.1} parent=11 // pred_fallthru
          _
      $region12: #{tpu_custom_call.1} parent=5 // pred_fallthru
        _
      %p137 = scmp.lt.s32.totalorder %s15, 2
      // Predicated region
      $region17: #{tpu_custom_call.1} parent=5 // pred_check
        %p138 = pneg %p137
      $region18: #{tpu_custom_call.1} parent=5 // pred_check_branch
        %140 = sbr.rel (%p138) target = $region20
      $region19: #{tpu_custom_call.1} parent=5 // pred_region
        // Predicated region
        $region21: #{tpu_custom_call.1} parent=19 // pred_check
          %p141 = pneg %p73
        $region22: #{tpu_custom_call.1} parent=19 // pred_check_branch
          %143 = sbr.rel (%p141) target = $region24
        $region23: #{tpu_custom_call.1} parent=19 // pred_region
          %s144 = sand.u32 %s63, 1
          %s145 = scalar_lea.sflag [#allocation6], %s144
          %s146 = sand.u32 %s63, 1
          %s147 = scalar_lea.vmem [#allocation5], %s146
          %149 = vsyncadd %s145, 0
          %s150 = scalar_lea.hbm %s1, %s23
          %s152 = sshll.u32 %s150, 4
          %s153 = int_to_ptr.hbm [resolvable:$true] %s152
          %s154 = sshll.u32 %s147, 4
          %s155 = int_to_ptr.vmem [resolvable:$true] %s154
          %157 = dma.hbm_to_vmem [thread:$0]  %s153, 16, %s155, %s145
        $region24: #{tpu_custom_call.1} parent=19 // pred_fallthru
          _
      $region20: #{tpu_custom_call.1} parent=5 // pred_fallthru
        _
      %p158 = scmp.le.s32.totalorder 1, %s15
      %p159 = scmp.lt.s32.totalorder %s15, 3
      %p160 = pnand %p158, %p159
      %p161 = pneg %p160
      // Predicated region
      $region25: #{tpu_custom_call.1} parent=5 // pred_check
        _
      $region26: #{tpu_custom_call.1} parent=5 // pred_check_branch
        %163 = sbr.rel (%p160) target = $region28
      $region27: #{tpu_custom_call.1} parent=5 // pred_region
        %s164 = ssub.s32 %s15, 1
        // Predicated region
        $region29: #{tpu_custom_call.1} parent=27 // pred_check
          %p165 = pneg %p53
        $region30: #{tpu_custom_call.1} parent=27 // pred_check_branch
          %167 = sbr.rel (%p165) target = $region32
        $region31: #{tpu_custom_call.1} parent=27 // pred_region
          %169 = dma.done [#allocation3], 256
        $region32: #{tpu_custom_call.1} parent=27 // pred_fallthru
          _
        %s170 = sand.u32 %s66, 1
        %s171 = scalar_lea.sflag [#allocation6], %s170
        %s172 = sand.u32 %s66, 1
        %s173 = scalar_lea.vmem [#allocation5], %s172
        // Predicated region
        $region33: #{tpu_custom_call.1} parent=27 // pred_check
          %p174 = pneg %p79
        $region34: #{tpu_custom_call.1} parent=27 // pred_check_branch
          %176 = sbr.rel (%p174) target = $region36
        $region35: #{tpu_custom_call.1} parent=27 // pred_region
          %178 = dma.done %s171, 16
        $region36: #{tpu_custom_call.1} parent=27 // pred_fallthru
          _
        %p179 = pneg %p53
        %p180 = pneg %p50
        %s181 = sand.u32 %s66, 1
        %s182 = scalar_lea.sflag [#allocation6], %s181
        %s183 = sand.u32 %s66, 1
        %s184 = scalar_lea.vmem [#allocation5], %s183
        %p185 = pneg %p79
        %p186 = pneg %p76
        %p187 = pneg %p107
        %p188 = pneg %p104
        %s189 = sand.u32 %s94, 1
        %s190 = scalar_lea.sflag [#allocation4], %s189
        %s191 = sand.u32 %s94, 1
        %s192 = smul.addr %s191, 8
        %s193 = scalar_lea.vmem [#allocation7], %s192
        %v194 = vlaneseq
        %v195 = vshrl.u32 %v194, 7
        %v196 = vadd.s32 %v195, 8
        %v197 = vadd.s32 %v195, 16
        %v198 = vadd.s32 %v195, 24
        %v199 = vadd.s32 %v195, 32
        %v200 = vadd.s32 %v195, 40
        %v201 = vadd.s32 %v195, 48
        %v202 = vadd.s32 %v195, 56
        %v203 = vadd.s32 %v195, 64
        %v204 = vadd.s32 %v195, 72
        %v205 = vadd.s32 %v195, 80
        %v206 = vadd.s32 %v195, 88
        %v207 = vadd.s32 %v195, 96
        %v208 = vadd.s32 %v195, 104
        %v209 = vadd.s32 %v195, 112
        %v210 = vadd.s32 %v195, 120
        %v211 = vadd.s32 %v195, 128
        %v212 = vadd.s32 %v195, 136
        %v213 = vadd.s32 %v195, 144
        %v214 = vadd.s32 %v195, 152
        %v215 = vadd.s32 %v195, 160
        %v216 = vadd.s32 %v195, 168
        %v217 = vadd.s32 %v195, 176
        %v218 = vadd.s32 %v195, 184
        %v219 = vadd.s32 %v195, 192
        %v220 = vadd.s32 %v195, 200
        %v221 = vadd.s32 %v195, 208
        %v222 = vadd.s32 %v195, 216
        %v223 = vadd.s32 %v195, 224
        %v224 = vadd.s32 %v195, 232
        %v225 = vadd.s32 %v195, 240
        %v226 = vadd.s32 %v195, 248
        %v227 = vld [vmem:[%s173] sm:$0x1]
        %v228 = vperm.slane %v227, 0
        %vm229 = vcmp.eq.s32.totalorder %v195, %v228
        %vm230 = vcmp.eq.s32.totalorder %v196, %v228
        %vm231 = vcmp.eq.s32.totalorder %v197, %v228
        %vm232 = vcmp.eq.s32.totalorder %v198, %v228
        %vm233 = vcmp.eq.s32.totalorder %v199, %v228
        %vm234 = vcmp.eq.s32.totalorder %v200, %v228
        %vm235 = vcmp.eq.s32.totalorder %v201, %v228
        %vm236 = vcmp.eq.s32.totalorder %v202, %v228
        %vm237 = vcmp.eq.s32.totalorder %v203, %v228
        %vm238 = vcmp.eq.s32.totalorder %v204, %v228
        %vm239 = vcmp.eq.s32.totalorder %v205, %v228
        %vm240 = vcmp.eq.s32.totalorder %v206, %v228
        %vm241 = vcmp.eq.s32.totalorder %v207, %v228
        %vm242 = vcmp.eq.s32.totalorder %v208, %v228
        %vm243 = vcmp.eq.s32.totalorder %v209, %v228
        %vm244 = vcmp.eq.s32.totalorder %v210, %v228
        %vm245 = vcmp.eq.s32.totalorder %v211, %v228
        %vm246 = vcmp.eq.s32.totalorder %v212, %v228
        %vm247 = vcmp.eq.s32.totalorder %v213, %v228
        %vm248 = vcmp.eq.s32.totalorder %v214, %v228
        %vm249 = vcmp.eq.s32.totalorder %v215, %v228
        %vm250 = vcmp.eq.s32.totalorder %v216, %v228
        %vm251 = vcmp.eq.s32.totalorder %v217, %v228
        %vm252 = vcmp.eq.s32.totalorder %v218, %v228
        %vm253 = vcmp.eq.s32.totalorder %v219, %v228
        %vm254 = vcmp.eq.s32.totalorder %v220, %v228
        %vm255 = vcmp.eq.s32.totalorder %v221, %v228
        %vm256 = vcmp.eq.s32.totalorder %v222, %v228
        %vm257 = vcmp.eq.s32.totalorder %v223, %v228
        %vm258 = vcmp.eq.s32.totalorder %v224, %v228
        %vm259 = vcmp.eq.s32.totalorder %v225, %v228
        %vm260 = vcmp.eq.s32.totalorder %v226, %v228
        %v261 = vsel %vm229, 1, 0
        %v262 = vsel %vm230, 1, 0
        %v263 = vsel %vm231, 1, 0
        %v264 = vsel %vm232, 1, 0
        %v265 = vsel %vm233, 1, 0
        %v266 = vsel %vm234, 1, 0
        %v267 = vsel %vm235, 1, 0
        %v268 = vsel %vm236, 1, 0
        %v269 = vsel %vm237, 1, 0
        %v270 = vsel %vm238, 1, 0
        %v271 = vsel %vm239, 1, 0
        %v272 = vsel %vm240, 1, 0
        %v273 = vsel %vm241, 1, 0
        %v274 = vsel %vm242, 1, 0
        %v275 = vsel %vm243, 1, 0
        %v276 = vsel %vm244, 1, 0
        %v277 = vsel %vm245, 1, 0
        %v278 = vsel %vm246, 1, 0
        %v279 = vsel %vm247, 1, 0
        %v280 = vsel %vm248, 1, 0
        %v281 = vsel %vm249, 1, 0
        %v282 = vsel %vm250, 1, 0
        %v283 = vsel %vm251, 1, 0
        %v284 = vsel %vm252, 1, 0
        %v285 = vsel %vm253, 1, 0
        %v286 = vsel %vm254, 1, 0
        %v287 = vsel %vm255, 1, 0
        %v288 = vsel %vm256, 1, 0
        %v289 = vsel %vm257, 1, 0
        %v290 = vsel %vm258, 1, 0
        %v291 = vsel %vm259, 1, 0
        %v292 = vsel %vm260, 1, 0
        %v293 = vcvt.s32.f32 %v261
        %v294 = vcvt.s32.f32 %v262
        %v295 = vcvt.s32.f32 %v263
        %v296 = vcvt.s32.f32 %v264
        %v297 = vcvt.s32.f32 %v265
        %v298 = vcvt.s32.f32 %v266
        %v299 = vcvt.s32.f32 %v267
        %v300 = vcvt.s32.f32 %v268
        %v301 = vcvt.s32.f32 %v269
        %v302 = vcvt.s32.f32 %v270
        %v303 = vcvt.s32.f32 %v271
        %v304 = vcvt.s32.f32 %v272
        %v305 = vcvt.s32.f32 %v273
        %v306 = vcvt.s32.f32 %v274
        %v307 = vcvt.s32.f32 %v275
        %v308 = vcvt.s32.f32 %v276
        %v309 = vcvt.s32.f32 %v277
        %v310 = vcvt.s32.f32 %v278
        %v311 = vcvt.s32.f32 %v279
        %v312 = vcvt.s32.f32 %v280
        %v313 = vcvt.s32.f32 %v281
        %v314 = vcvt.s32.f32 %v282
        %v315 = vcvt.s32.f32 %v283
        %v316 = vcvt.s32.f32 %v284
        %v317 = vcvt.s32.f32 %v285
        %v318 = vcvt.s32.f32 %v286
        %v319 = vcvt.s32.f32 %v287
        %v320 = vcvt.s32.f32 %v288
        %v321 = vcvt.s32.f32 %v289
        %v322 = vcvt.s32.f32 %v290
        %v323 = vcvt.s32.f32 %v291
        %v324 = vcvt.s32.f32 %v292
        %v325 = vld [vmem:[#allocation2] sm:$0xff]
        %v326 = vld [vmem:[#allocation2 + $0x8] sm:$0xff]
        %327 = vmatpush.msra.mxu0 %v308
        %328 = vmatpush.msra.mxu0 %v307
        %329 = vmatpush.msra.mxu0 %v306
        %330 = vmatpush.msra.mxu0 %v305
        %331 = vmatpush.msra.mxu0 %v304
        %332 = vmatpush.msra.mxu0 %v303
        %333 = vmatpush.msra.mxu0 %v302
        %334 = vmatpush.msra.mxu0 %v301
        %335 = vmatpush.msra.mxu0 %v300
        %336 = vmatpush.msra.mxu0 %v299
        %337 = vmatpush.msra.mxu0 %v298
        %338 = vmatpush.msra.mxu0 %v297
        %339 = vmatpush.msra.mxu0 %v296
        %340 = vmatpush.msra.mxu0 %v295
        %341 = vmatpush.msra.mxu0 %v294
        %342 = vmatpush.msra.mxu0 %v293
        %343 = vmatmul.f32.gmra.mxu0 %v325
        %v344 = vpop.f32.mrf.mxu0
        %v345 = vadd.f32 0.0, %v344
        %346 = vdwg.mxu0
        %347 = vmatpush.msra.mxu0 %v324
        %348 = vmatpush.msra.mxu0 %v323
        %349 = vmatpush.msra.mxu0 %v322
        %350 = vmatpush.msra.mxu0 %v321
        %351 = vmatpush.msra.mxu0 %v320
        %352 = vmatpush.msra.mxu0 %v319
        %353 = vmatpush.msra.mxu0 %v318
        %354 = vmatpush.msra.mxu0 %v317
        %355 = vmatpush.msra.mxu0 %v316
        %356 = vmatpush.msra.mxu0 %v315
        %357 = vmatpush.msra.mxu0 %v314
        %358 = vmatpush.msra.mxu0 %v313
        %359 = vmatpush.msra.mxu0 %v312
        %360 = vmatpush.msra.mxu0 %v311
        %361 = vmatpush.msra.mxu0 %v310
        %362 = vmatpush.msra.mxu0 %v309
        %363 = vmatmul.f32.gmra.mxu0 %v326
        %v364 = vpop.f32.mrf.mxu0
        %v365 = vadd.f32 %v345, %v364
        %366 = vdwg.mxu0
        %367 = vst [vmem:[%s193] sm:$0xff] %v365
        %s368 = sand.u32 %s94, 1
        %s369 = scalar_lea.sflag [#allocation4], %s368
        %s370 = sand.u32 %s94, 1
        %s371 = smul.addr %s370, 8
        %s372 = scalar_lea.vmem [#allocation7], %s371
        // Predicated region
        $region37: #{tpu_custom_call.1} parent=27 // pred_check
          %p373 = pneg %p104
        $region38: #{tpu_custom_call.1} parent=27 // pred_check_branch
          %375 = sbr.rel (%p373) target = $region40
        $region39: #{tpu_custom_call.1} parent=27 // pred_region
          %377 = vsyncadd %s369, 0
          %s378 = smul.addr %s24, 2
          %s379 = sadd.s32 %s25, %s378
          %s380 = smul.addr %s379, 8
          %s381 = scalar_lea.hbm %s2, %s380
          %s383 = sshll.u32 %s372, 4
          %s384 = int_to_ptr.vmem [resolvable:$true] %s383
          %s385 = sshll.u32 %s381, 4
          %s386 = int_to_ptr.hbm [resolvable:$true] %s385
          %388 = dma.vmem_to_hbm [thread:$0]  %s384, 128, %s386, %s369
        $region40: #{tpu_custom_call.1} parent=27 // pred_fallthru
          _
      $region28: #{tpu_custom_call.1} parent=5 // pred_fallthru
        _
      %p389 = scmp.le.s32.totalorder 2, %s15
      // Predicated region
      $region41: #{tpu_custom_call.1} parent=5 // pred_check
        %p390 = pneg %p389
      $region42: #{tpu_custom_call.1} parent=5 // pred_check_branch
        %392 = sbr.rel (%p390) target = $region44
      $region43: #{tpu_custom_call.1} parent=5 // pred_region
        %s393 = ssub.s32 %s15, 2
        // Predicated region
        $region45: #{tpu_custom_call.1} parent=43 // pred_check
          %p394 = pneg %p110
        $region46: #{tpu_custom_call.1} parent=43 // pred_check_branch
          %396 = sbr.rel (%p394) target = $region48
        $region47: #{tpu_custom_call.1} parent=43 // pred_region
          %s397 = sand.u32 %s95, 1
          %s398 = scalar_lea.sflag [#allocation4], %s397
          %s399 = sand.u32 %s95, 1
          %s400 = smul.addr %s399, 8
          %s401 = scalar_lea.vmem [#allocation7], %s400
          %403 = dma.done %s398, 128
        $region48: #{tpu_custom_call.1} parent=43 // pred_fallthru
          _
      $region44: #{tpu_custom_call.1} parent=5 // pred_fallthru
        _
    $region6: #{tpu_custom_call.1} parent=1 // loop_footer
      %s19 = sadd.s32 1, %s15
    $region7: #{tpu_custom_call.1} parent=1 // loop_footer_branch
      %14 = sbr.rel target = $region3
    $region8: #{tpu_custom_call.1} parent=1 // loop_exit
      _
    %404 = vsyncpa [#allocation3], 1
    %s405 = scalar_lea.sflag [#allocation3], 1
    %406 = vsyncpa %s405, 1
    %407 = vsyncpa [#allocation6], 1
    %s408 = scalar_lea.sflag [#allocation6], 1
    %409 = vsyncpa %s408, 1
    %410 = vsyncpa [#allocation4], 1
    %s411 = scalar_lea.sflag [#allocation4], 1
    %412 = vsyncpa %s411, 1

</llo_original>
